<compile_context>
chip_gen: v7x
topology: tpu7x:2x2x1
jax: 0.10.0
libtpu: 0.0.40
codegen_flags: <defaults>
</compile_context>

<pallas_src>
import functools
import numpy as np
import jax
import jax.numpy as jnp
from jax import lax
from jax.experimental import pallas as pl
from jax.experimental.pallas import tpu as pltpu

LOG2E = float(np.log2(np.exp(1.0)))


def _round_up(x, m):
    return ((x + m - 1) // m) * m


def _gdc_kernel(b1_ref, b2_ref, w1z_ref, w1d_ref, w2d_ref, xz_ref, xd_ref,
                out_ref, *, batch_size, n_valid):
    # b1_ref/b2_ref : (1,) SMEM scalars
    # w1z_ref       : (data_dim, 1) VMEM  (layers1 weights for the z features)
    # w1d_ref       : (out_dim, 1)  VMEM  (layers1 weights for the D features)
    # w2d_ref       : (out_dim, 1)  VMEM  (layers2 weights)
    # xz_ref        : (data_dim, TILE_N) VMEM  lane-tile of concat([z_tr,z_eval]).T
    # xd_ref        : (out_dim,  TILE_N) VMEM  lane-tile of concat([D_tr,D_eval]).T
    # out_ref       : (4,) SMEM accumulator ->
    #     [sum(pred_xy), sum(exp(pred_x_y)), sum(pred_xy_D), sum(exp(pred_x_y_D))]
    i = pl.program_id(0)

    @pl.when(i == 0)
    def _init():
        out_ref[0] = jnp.float32(0.0)
        out_ref[1] = jnp.float32(0.0)
        out_ref[2] = jnp.float32(0.0)
        out_ref[3] = jnp.float32(0.0)

    xz = xz_ref[...]                      # (data_dim, TILE_N)
    xd = xd_ref[...]                      # (out_dim,  TILE_N)
    tile_n = xz.shape[1]

    # Lane-dense linear heads: weights broadcast over lanes (batch), reduce
    # over the tiny feature axis on sublanes (XLU). No MXU.
    logits1 = (jnp.sum(xz * w1z_ref[...], axis=0, keepdims=True)
               + jnp.sum(xd * w1d_ref[...], axis=0, keepdims=True)
               + b1_ref[0])                                   # (1, TILE_N)
    logits2 = jnp.sum(xd * w2d_ref[...], axis=0, keepdims=True) + b2_ref[0]

    # Lane masks: columns [0, B) are train rows, [B, 2B) are eval rows,
    # columns >= 2B are padding.
    col = lax.broadcasted_iota(jnp.int32, (1, tile_n), 1) + i * tile_n
    m_tr = col < batch_size
    m_ev = jnp.logical_and(col >= batch_size, col < n_valid)

    m_tr_f = m_tr.astype(jnp.float32)
    neg_inf = jnp.float32(-jnp.inf)
    e1 = jnp.exp(jnp.where(m_ev, logits1, neg_inf))           # exp(-inf) == 0
    e2 = jnp.exp(jnp.where(m_ev, logits2, neg_inf))

    out_ref[0] += jnp.sum(logits1 * m_tr_f)
    out_ref[1] += jnp.sum(e1)
    out_ref[2] += jnp.sum(logits2 * m_tr_f)
    out_ref[3] += jnp.sum(e2)


def gdcnet_noy_forward(params, z_tr, z_eval, D_tr, D_eval, avg_et,
                       unbiased_loss, *, max_tile_n=2048):
    """Pallas implementation of GDCNet_noy.forward."""
    w1, b1, w2, b2 = params   # w1: (data_dim+out_dim, 1), b1: (1,), w2: (out_dim, 1), b2: (1,)
    B = z_tr.shape[0]
    data_dim = z_tr.shape[1]
    out_dim = D_tr.shape[1]
    N = 2 * B

    # Transposed, batch-on-lanes layout (no 128-lane feature padding in HBM).
    xz = jnp.concatenate([z_tr, z_eval], axis=0).astype(jnp.float32).T   # (data_dim, N)
    xd = jnp.concatenate([D_tr, D_eval], axis=0).astype(jnp.float32).T   # (out_dim,  N)

    tile_n = max(128, min(_round_up(N, 128), (max_tile_n // 128) * 128))
    n_pad = _round_up(N, tile_n)
    if n_pad != N:
        xz = jnp.pad(xz, ((0, 0), (0, n_pad - N)))
        xd = jnp.pad(xd, ((0, 0), (0, n_pad - N)))
    grid = (n_pad // tile_n,)

    w1f = w1.astype(jnp.float32)
    w1z = w1f[:data_dim, :]                    # (data_dim, 1)
    w1d = w1f[data_dim:, :]                    # (out_dim, 1)
    w2d = w2.astype(jnp.float32)               # (out_dim, 1)

    kernel = functools.partial(_gdc_kernel, batch_size=B, n_valid=N)

    stats = pl.pallas_call(
        kernel,
        out_shape=jax.ShapeDtypeStruct((4,), jnp.float32),
        grid=grid,
        in_specs=[
            pl.BlockSpec(memory_space=pltpu.MemorySpace.SMEM),   # b1
            pl.BlockSpec(memory_space=pltpu.MemorySpace.SMEM),   # b2
            pl.BlockSpec(memory_space=pltpu.MemorySpace.VMEM),   # w1z (whole)
            pl.BlockSpec(memory_space=pltpu.MemorySpace.VMEM),   # w1d (whole)
            pl.BlockSpec(memory_space=pltpu.MemorySpace.VMEM),   # w2d (whole)
            pl.BlockSpec((data_dim, tile_n), lambda i: (0, i)),  # xz lane tile
            pl.BlockSpec((out_dim, tile_n), lambda i: (0, i)),   # xd lane tile
        ],
        out_specs=pl.BlockSpec(memory_space=pltpu.MemorySpace.SMEM),
        compiler_params=pltpu.CompilerParams(
            dimension_semantics=("arbitrary",)),
    )(b1.astype(jnp.float32), b2.astype(jnp.float32), w1z, w1d, w2d, xz, xd)

    inv_b = 1.0 / float(B)
    mean_xy = stats[0] * inv_b
    mean_exp_x_y = stats[1] * inv_b
    mean_xy_D = stats[2] * inv_b
    mean_exp_x_y_D = stats[3] * inv_b

    if unbiased_loss:
        avg_et = 0.01 * avg_et + 0.99 * mean_exp_x_y
        # (PyTorch's .detach() only affects gradients; forward values identical)
        loss1 = LOG2E * (mean_xy - (mean_exp_x_y / avg_et) * jnp.log(mean_exp_x_y))
        loss2 = LOG2E * (mean_xy_D - (mean_exp_x_y_D / avg_et) * jnp.log(mean_exp_x_y_D))
        loss = loss1 - loss2
    else:
        loss1 = LOG2E * (mean_xy - jnp.log(mean_exp_x_y))
        loss2 = LOG2E * (mean_xy_D - jnp.log(mean_exp_x_y_D))
        loss = loss1 - loss2
    return loss, avg_et


def gdcnet_noy_reference(params, z_tr, z_eval, D_tr, D_eval, avg_et, unbiased_loss):
    """Pure-JAX reference, mirrors the PyTorch code line by line."""
    w1, b1, w2, b2 = params
    B = z_tr.shape[0]
    tiled_x = jnp.concatenate([z_tr, z_eval], axis=0)
    concat_y = jnp.concatenate([D_tr, D_eval], axis=0)
    inputs = jnp.concatenate([tiled_x, concat_y], axis=1)
    logits = inputs @ w1 + b1
    pred_xy, pred_x_y = logits[:B], logits[B:]
    logits_D = concat_y @ w2 + b2
    pred_xy_D, pred_x_y_D = logits_D[:B], logits_D[B:]
    if unbiased_loss:
        avg_et = 0.01 * avg_et + 0.99 * jnp.mean(jnp.exp(pred_x_y))
        loss1 = LOG2E * (jnp.mean(pred_xy) - jnp.mean(jnp.exp(pred_x_y) / avg_et)
                         * jnp.log(jnp.mean(jnp.exp(pred_x_y))))
        loss2 = LOG2E * (jnp.mean(pred_xy_D) - jnp.mean(jnp.exp(pred_x_y_D) / avg_et)
                         * jnp.log(jnp.mean(jnp.exp(pred_x_y_D))))
        loss = loss1 - loss2
    else:
        loss1 = LOG2E * (jnp.mean(pred_xy) - jnp.log(jnp.mean(jnp.exp(pred_x_y))))
        loss2 = LOG2E * (jnp.mean(pred_xy_D) - jnp.log(jnp.mean(jnp.exp(pred_x_y_D))))
        loss = loss1 - loss2
    return loss, avg_et


def init_params(key, data_dim, out_dim=1):
    # nn.Linear(out_dim + data_dim, 1) and nn.Linear(out_dim, 1), stored as (in, out).
    k1, k2, k3, k4 = jax.random.split(key, 4)
    in1 = out_dim + data_dim
    bound1 = 1.0 / np.sqrt(in1)
    bound2 = 1.0 / np.sqrt(out_dim)
    w1 = jax.random.uniform(k1, (in1, 1), jnp.float32, -bound1, bound1)
    b1 = jax.random.uniform(k2, (1,), jnp.float32, -bound1, bound1)
    w2 = jax.random.uniform(k3, (out_dim, 1), jnp.float32, -bound2, bound2)
    b2 = jax.random.uniform(k4, (1,), jnp.float32, -bound2, bound2)
    return (w1, b1, w2, b2)


if __name__ == "__main__":
    key = jax.random.PRNGKey(0)
    ok = True

    # config 1: tiny demo shapes (single lane tile)
    # config 2: B=200 with a forced 128-lane tile -> 4-step grid, accumulator
    #           path and intra-tile train/eval/pad boundaries all exercised.
    for (batch, data_dim, out_dim, max_tile) in [(8, 4, 1, 2048), (200, 4, 1, 128)]:
        kp, kz1, kz2, kd1, kd2 = jax.random.split(jax.random.fold_in(key, batch), 5)
        params = init_params(kp, data_dim, out_dim)
        z_tr = jax.random.normal(kz1, (batch, data_dim), jnp.float32)
        z_eval = jax.random.normal(kz2, (batch, data_dim), jnp.float32)
        D_tr = jax.random.normal(kd1, (batch, out_dim), jnp.float32)
        D_eval = jax.random.normal(kd2, (batch, out_dim), jnp.float32)
        avg_et = jnp.float32(1.0)

        for unbiased in (False, True):
            loss, new_avg_et = gdcnet_noy_forward(
                params, z_tr, z_eval, D_tr, D_eval, avg_et, unbiased,
                max_tile_n=max_tile)
            loss = jax.block_until_ready(loss)
            new_avg_et = jax.block_until_ready(new_avg_et)

            loss_ref, avg_et_ref = gdcnet_noy_reference(
                params, z_tr, z_eval, D_tr, D_eval, avg_et, unbiased)
            ok &= bool(jnp.allclose(loss, loss_ref, rtol=1e-5, atol=1e-5))
            ok &= bool(jnp.allclose(new_avg_et, avg_et_ref, rtol=1e-5, atol=1e-5))

    if ok:
        print("KERNEL_OK")
    else:
        print("KERNEL_MISMATCH")
</pallas_src>

<mosaic_0001>
module attributes {stable_mosaic.version = 11 : i64} {
  func.func @_gdc_kernel(%arg0: i32, %arg1: memref<1xf32, #tpu.memory_space<smem>>, %arg2: memref<1xf32, #tpu.memory_space<smem>>, %arg3: memref<4x1xf32, #tpu.memory_space<vmem>>, %arg4: memref<1x1xf32, #tpu.memory_space<vmem>>, %arg5: memref<1x1xf32, #tpu.memory_space<vmem>>, %arg6: memref<4x128xf32, #tpu.memory_space<vmem>>, %arg7: memref<1x128xf32, #tpu.memory_space<vmem>>, %arg8: memref<4xf32, #tpu.memory_space<smem>>) attributes {dimension_semantics = [#tpu.dimension_semantics<arbitrary>], iteration_bounds = array<i64: 1>, scalar_prefetch = 0 : i64, scratch_operands = 0 : i64, tpu.core_type = #tpu.core_type<tc>, window_params = [{transform_indices = @transform_0, window_bounds = array<i64: 1>}, {transform_indices = @transform_1, window_bounds = array<i64: 1>}, {pipeline_mode = #tpu.pipeline_mode<synchronous>, transform_indices = @transform_2, window_bounds = array<i64: 4, 1>}, {pipeline_mode = #tpu.pipeline_mode<synchronous>, transform_indices = @transform_3, window_bounds = array<i64: 1, 1>}, {pipeline_mode = #tpu.pipeline_mode<synchronous>, transform_indices = @transform_4, window_bounds = array<i64: 1, 1>}, {transform_indices = @transform_5, window_bounds = array<i64: 4, 128>}, {transform_indices = @transform_6, window_bounds = array<i64: 1, 128>}, {transform_indices = @transform_7, window_bounds = array<i64: 4>}]} {
    %c0_i32 = arith.constant 0 : i32
    %0 = arith.cmpi eq, %arg0, %c0_i32 : i32
    %1 = arith.extui %0 : i1 to i32
    %c0_i32_0 = arith.constant 0 : i32
    %2 = arith.cmpi ne, %1, %c0_i32_0 : i32
    scf.if %2 {
      %cst_26 = arith.constant 0.000000e+00 : f32
      %c0_27 = arith.constant 0 : index
      %76 = memref.load %arg8[%c0_27] : memref<4xf32, #tpu.memory_space<smem>>
      memref.store %cst_26, %arg8[%c0_27] : memref<4xf32, #tpu.memory_space<smem>>
      %cst_28 = arith.constant 0.000000e+00 : f32
      %c1_29 = arith.constant 1 : index
      %77 = memref.load %arg8[%c1_29] : memref<4xf32, #tpu.memory_space<smem>>
      memref.store %cst_28, %arg8[%c1_29] : memref<4xf32, #tpu.memory_space<smem>>
      %cst_30 = arith.constant 0.000000e+00 : f32
      %c2_31 = arith.constant 2 : index
      %78 = memref.load %arg8[%c2_31] : memref<4xf32, #tpu.memory_space<smem>>
      memref.store %cst_30, %arg8[%c2_31] : memref<4xf32, #tpu.memory_space<smem>>
      %cst_32 = arith.constant 0.000000e+00 : f32
      %c3_33 = arith.constant 3 : index
      %79 = memref.load %arg8[%c3_33] : memref<4xf32, #tpu.memory_space<smem>>
      memref.store %cst_32, %arg8[%c3_33] : memref<4xf32, #tpu.memory_space<smem>>
    } else {
    }
    %c0 = arith.constant 0 : index
    %c0_1 = arith.constant 0 : index
    %3 = vector.load %arg6[%c0, %c0_1] : memref<4x128xf32, #tpu.memory_space<vmem>>, vector<4x128xf32>
    %c0_2 = arith.constant 0 : index
    %c0_3 = arith.constant 0 : index
    %4 = vector.load %arg7[%c0_2, %c0_3] : memref<1x128xf32, #tpu.memory_space<vmem>>, vector<1x128xf32>
    %c0_4 = arith.constant 0 : index
    %c0_5 = arith.constant 0 : index
    %5 = vector.load %arg3[%c0_4, %c0_5] : memref<4x1xf32, #tpu.memory_space<vmem>>, vector<4x1xf32>
    %6 = vector.broadcast %5 : vector<4x1xf32> to vector<4x128xf32>
    %7 = arith.mulf %3, %6 : vector<4x128xf32>
    %cst = arith.constant dense<0.000000e+00> : vector<128xf32>
    %8 = vector.multi_reduction <add>, %7, %cst [0] : vector<4x128xf32> to vector<128xf32>
    %9 = vector.shape_cast %8 : vector<128xf32> to vector<1x128xf32>
    %c0_6 = arith.constant 0 : index
    %c0_7 = arith.constant 0 : index
    %10 = vector.load %arg4[%c0_6, %c0_7] : memref<1x1xf32, #tpu.memory_space<vmem>>, vector<1x1xf32>
    %11 = vector.broadcast %10 : vector<1x1xf32> to vector<1x128xf32>
    %12 = arith.mulf %4, %11 : vector<1x128xf32>
    %cst_8 = arith.constant dense<0.000000e+00> : vector<128xf32>
    %13 = vector.multi_reduction <add>, %12, %cst_8 [0] : vector<1x128xf32> to vector<128xf32>
    %14 = vector.shape_cast %13 : vector<128xf32> to vector<1x128xf32>
    %15 = arith.addf %9, %14 : vector<1x128xf32>
    %c0_9 = arith.constant 0 : index
    %16 = memref.load %arg1[%c0_9] : memref<1xf32, #tpu.memory_space<smem>>
    %17 = vector.broadcast %16 : f32 to vector<1x128xf32>
    %18 = arith.addf %15, %17 : vector<1x128xf32>
    %c0_10 = arith.constant 0 : index
    %c0_11 = arith.constant 0 : index
    %19 = vector.load %arg5[%c0_10, %c0_11] : memref<1x1xf32, #tpu.memory_space<vmem>>, vector<1x1xf32>
    %20 = vector.broadcast %19 : vector<1x1xf32> to vector<1x128xf32>
    %21 = arith.mulf %4, %20 : vector<1x128xf32>
    %cst_12 = arith.constant dense<0.000000e+00> : vector<128xf32>
    %22 = vector.multi_reduction <add>, %21, %cst_12 [0] : vector<1x128xf32> to vector<128xf32>
    %23 = vector.shape_cast %22 : vector<128xf32> to vector<1x128xf32>
    %c0_13 = arith.constant 0 : index
    %24 = memref.load %arg2[%c0_13] : memref<1xf32, #tpu.memory_space<smem>>
    %25 = vector.broadcast %24 : f32 to vector<1x128xf32>
    %26 = arith.addf %23, %25 : vector<1x128xf32>
    %27 = tpu.iota {dimensions = array<i32: 1>} : vector<1x128xi32>
    %c128_i32 = arith.constant 128 : i32
    %28 = arith.muli %arg0, %c128_i32 : i32
    %29 = vector.broadcast %28 : i32 to vector<1x128xi32>
    %30 = arith.addi %27, %29 : vector<1x128xi32>
    %c8_i32 = arith.constant 8 : i32
    %31 = vector.broadcast %c8_i32 : i32 to vector<1x128xi32>
    %32 = arith.cmpi slt, %30, %31 : vector<1x128xi32>
    %c8_i32_14 = arith.constant 8 : i32
    %33 = vector.broadcast %c8_i32_14 : i32 to vector<1x128xi32>
    %34 = arith.cmpi sge, %30, %33 : vector<1x128xi32>
    %c16_i32 = arith.constant 16 : i32
    %35 = vector.broadcast %c16_i32 : i32 to vector<1x128xi32>
    %36 = arith.cmpi slt, %30, %35 : vector<1x128xi32>
    %37 = arith.andi %34, %36 : vector<1x128xi1>
    %38 = arith.extui %32 : vector<1x128xi1> to vector<1x128xi32>
    %39 = arith.sitofp %38 : vector<1x128xi32> to vector<1x128xf32>
    %cst_15 = arith.constant 0xFF800000 : f32
    %40 = vector.broadcast %cst_15 : f32 to vector<1x128xf32>
    %41 = arith.select %37, %18, %40 : vector<1x128xi1>, vector<1x128xf32>
    %42 = math.exp %41 : vector<1x128xf32>
    %cst_16 = arith.constant 0xFF800000 : f32
    %43 = vector.broadcast %cst_16 : f32 to vector<1x128xf32>
    %44 = arith.select %37, %26, %43 : vector<1x128xi1>, vector<1x128xf32>
    %45 = math.exp %44 : vector<1x128xf32>
    %c0_17 = arith.constant 0 : index
    %46 = memref.load %arg8[%c0_17] : memref<4xf32, #tpu.memory_space<smem>>
    %47 = arith.mulf %18, %39 : vector<1x128xf32>
    %48 = vector.shape_cast %47 : vector<1x128xf32> to vector<1x1x128xf32>
    %cst_18 = arith.constant dense<0.000000e+00> : vector<1xf32>
    %49 = vector.multi_reduction <add>, %48, %cst_18 [1, 2] : vector<1x1x128xf32> to vector<1xf32>
    %50 = vector.shape_cast %49 : vector<1xf32> to vector<1x1x1xf32>
    %51 = vector.extract %50[0, 0, 0] : f32 from vector<1x1x1xf32>
    %52 = arith.addf %46, %51 : f32
    %c0_19 = arith.constant 0 : index
    %53 = memref.load %arg8[%c0_19] : memref<4xf32, #tpu.memory_space<smem>>
    memref.store %52, %arg8[%c0_19] : memref<4xf32, #tpu.memory_space<smem>>
    %c1 = arith.constant 1 : index
    %54 = memref.load %arg8[%c1] : memref<4xf32, #tpu.memory_space<smem>>
    %55 = vector.shape_cast %42 : vector<1x128xf32> to vector<1x1x128xf32>
    %cst_20 = arith.constant dense<0.000000e+00> : vector<1xf32>
    %56 = vector.multi_reduction <add>, %55, %cst_20 [1, 2] : vector<1x1x128xf32> to vector<1xf32>
    %57 = vector.shape_cast %56 : vector<1xf32> to vector<1x1x1xf32>
    %58 = vector.extract %57[0, 0, 0] : f32 from vector<1x1x1xf32>
    %59 = arith.addf %54, %58 : f32
    %c1_21 = arith.constant 1 : index
    %60 = memref.load %arg8[%c1_21] : memref<4xf32, #tpu.memory_space<smem>>
    memref.store %59, %arg8[%c1_21] : memref<4xf32, #tpu.memory_space<smem>>
    %c2 = arith.constant 2 : index
    %61 = memref.load %arg8[%c2] : memref<4xf32, #tpu.memory_space<smem>>
    %62 = arith.mulf %26, %39 : vector<1x128xf32>
    %63 = vector.shape_cast %62 : vector<1x128xf32> to vector<1x1x128xf32>
    %cst_22 = arith.constant dense<0.000000e+00> : vector<1xf32>
    %64 = vector.multi_reduction <add>, %63, %cst_22 [1, 2] : vector<1x1x128xf32> to vector<1xf32>
    %65 = vector.shape_cast %64 : vector<1xf32> to vector<1x1x1xf32>
    %66 = vector.extract %65[0, 0, 0] : f32 from vector<1x1x1xf32>
    %67 = arith.addf %61, %66 : f32
    %c2_23 = arith.constant 2 : index
    %68 = memref.load %arg8[%c2_23] : memref<4xf32, #tpu.memory_space<smem>>
    memref.store %67, %arg8[%c2_23] : memref<4xf32, #tpu.memory_space<smem>>
    %c3 = arith.constant 3 : index
    %69 = memref.load %arg8[%c3] : memref<4xf32, #tpu.memory_space<smem>>
    %70 = vector.shape_cast %45 : vector<1x128xf32> to vector<1x1x128xf32>
    %cst_24 = arith.constant dense<0.000000e+00> : vector<1xf32>
    %71 = vector.multi_reduction <add>, %70, %cst_24 [1, 2] : vector<1x1x128xf32> to vector<1xf32>
    %72 = vector.shape_cast %71 : vector<1xf32> to vector<1x1x1xf32>
    %73 = vector.extract %72[0, 0, 0] : f32 from vector<1x1x1xf32>
    %74 = arith.addf %69, %73 : f32
    %c3_25 = arith.constant 3 : index
    %75 = memref.load %arg8[%c3_25] : memref<4xf32, #tpu.memory_space<smem>>
    memref.store %74, %arg8[%c3_25] : memref<4xf32, #tpu.memory_space<smem>>
    return
  }
  func.func @transform_0(%arg0: i32) -> i32 {
    %c0_i32 = arith.constant 0 : i32
    %c0_i32_0 = arith.constant 0 : i32
    return %c0_i32 : i32
  }
  func.func @transform_1(%arg0: i32) -> i32 {
    %c0_i32 = arith.constant 0 : i32
    %c0_i32_0 = arith.constant 0 : i32
    return %c0_i32 : i32
  }
  func.func @transform_2(%arg0: i32) -> (i32, i32) {
    %c0_i32 = arith.constant 0 : i32
    %c0_i32_0 = arith.constant 0 : i32
    %c0_i32_1 = arith.constant 0 : i32
    return %c0_i32, %c0_i32_0 : i32, i32
  }
  func.func @transform_3(%arg0: i32) -> (i32, i32) {
    %c0_i32 = arith.constant 0 : i32
    %c0_i32_0 = arith.constant 0 : i32
    %c0_i32_1 = arith.constant 0 : i32
    return %c0_i32, %c0_i32_0 : i32, i32
  }
  func.func @transform_4(%arg0: i32) -> (i32, i32) {
    %c0_i32 = arith.constant 0 : i32
    %c0_i32_0 = arith.constant 0 : i32
    %c0_i32_1 = arith.constant 0 : i32
    return %c0_i32, %c0_i32_0 : i32, i32
  }
  func.func @transform_5(%arg0: i32) -> (i32, i32) {
    %c0_i32 = arith.constant 0 : i32
    %c0_i32_0 = arith.constant 0 : i32
    return %c0_i32, %arg0 : i32, i32
  }
  func.func @transform_6(%arg0: i32) -> (i32, i32) {
    %c0_i32 = arith.constant 0 : i32
    %c0_i32_0 = arith.constant 0 : i32
    return %c0_i32, %arg0 : i32, i32
  }
  func.func @transform_7(%arg0: i32) -> i32 {
    %c0_i32 = arith.constant 0 : i32
    %c0_i32_0 = arith.constant 0 : i32
    return %c0_i32 : i32
  }
}

</mosaic_0001>

<llo_original>
// kernel: tpu_custom_call.1
$region0: #{tpu_custom_call.1}
  #allocation0 [shape = 'u32[]', space=smem, size = 0x4, offset = 0x4, fixed_abs, tag = 'smem constant byte address 0x4 - core index']
  #allocation1 [shape = 'u32[144,128]{1,0:T(1,128)}', space=vmem, size = 0x12000, scoped, tag = 'internal scratch']
  #allocation2 [shape = 'f32[1]{0:T(128)S(6)}', space=smem, size = 0x200, scoped, tag = 'scoped memory for tpu_custom_call.1']
  #allocation3 [shape = 'f32[1]{0:T(128)S(6)}', space=smem, size = 0x200, scoped, tag = 'scoped memory for tpu_custom_call.1']
  #allocation4 [shape = 'f32[1,1]{1,0:T(1,128)S(1)}', space=vmem, size = 0x200, scoped, tag = 'scoped memory for tpu_custom_call.1']
  #allocation5 [shape = 'f32[1,1]{1,0:T(1,128)S(1)}', space=vmem, size = 0x200, scoped, tag = 'scoped memory for tpu_custom_call.1']
  %s0 = inlined_call_operand.<no memory space> [shape: f32[1], index: 0, kind: input, shape index: {}]
  %s1 = inlined_call_operand.<no memory space> [shape: f32[1], index: 1, kind: input, shape index: {}]
  %s2 = inlined_call_operand.vmem [shape: f32[4,1], index: 2, kind: input, shape index: {}]
  %s3 = inlined_call_operand.<no memory space> [shape: f32[1,1], index: 3, kind: input, shape index: {}]
  %s4 = inlined_call_operand.<no memory space> [shape: f32[1,1], index: 4, kind: input, shape index: {}]
  %s5 = inlined_call_operand.vmem [shape: f32[4,128], index: 5, kind: input, shape index: {}]
  %s6 = inlined_call_operand.vmem [shape: f32[1,128], index: 6, kind: input, shape index: {}]
  %s7 = inlined_call_operand.hbm [shape: f32[4], index: 7, kind: output, shape index: {}]
  %s8 = sld [smem:[#allocation0]]
  $region42: #{tpu_custom_call.1} parent=0
    _
  %s10 = ssub.s32 1, %s8
  %s11 = scalar_select 0, %s10, %s8
  %12 = sst [smem:[#allocation2]] %s0
  %13 = sst [smem:[#allocation3]] %s1
  %v14 = vstv %s3
  %15 = vst [vmem:[#allocation4] sm:$0x1] %v14
  %v16 = vstv %s4
  %17 = vst [vmem:[#allocation5] sm:$0x1] %v16
  $region1: #{tpu_custom_call.1} parent=0
    #allocation6 [shape = 'u8[512]{0}', space=smem, size = 0x200, scoped, tag = 'output window, operand 0, single buffered']
    #allocation7 [shape = 's32[1]{0}', space=sflag, size = 0x4, scoped, tag = 'scoped memory for tpu_custom_call.1']
    %18 = vsyncpa [#allocation7], 0
    // Predicated region
    $region2: #{tpu_custom_call.1} parent=1 // pred_check
      _
    $region3: #{tpu_custom_call.1} parent=1 // pred_check_branch
      %20 = sbr.rel (0) target = $region5
    $region4: #{tpu_custom_call.1} parent=1 // pred_region
      _
    $region5: #{tpu_custom_call.1} parent=1 // pred_fallthru
      _
    // Predicated region
    $region6: #{tpu_custom_call.1} parent=1 // pred_check
      _
    $region7: #{tpu_custom_call.1} parent=1 // pred_check_branch
      %22 = sbr.rel (0) target = $region9
    $region8: #{tpu_custom_call.1} parent=1 // pred_region
      _
    $region9: #{tpu_custom_call.1} parent=1 // pred_fallthru
      _
    // Predicated region
    $region10: #{tpu_custom_call.1} parent=1 // pred_check
      _
    $region11: #{tpu_custom_call.1} parent=1 // pred_check_branch
      %24 = sbr.rel (0) target = $region13
    $region12: #{tpu_custom_call.1} parent=1 // pred_region
      _
    $region13: #{tpu_custom_call.1} parent=1 // pred_fallthru
      _
    // Predicated region
    $region14: #{tpu_custom_call.1} parent=1 // pred_check
      _
    $region15: #{tpu_custom_call.1} parent=1 // pred_check_branch
      %26 = sbr.rel (0) target = $region17
    $region16: #{tpu_custom_call.1} parent=1 // pred_region
      _
    $region17: #{tpu_custom_call.1} parent=1 // pred_fallthru
      _
    // Predicated region
    $region18: #{tpu_custom_call.1} parent=1 // pred_check
      _
    $region19: #{tpu_custom_call.1} parent=1 // pred_check_branch
      %28 = sbr.rel (0) target = $region21
    $region20: #{tpu_custom_call.1} parent=1 // pred_region
      _
    $region21: #{tpu_custom_call.1} parent=1 // pred_fallthru
      _
    // Predicated region
    $region22: #{tpu_custom_call.1} parent=1 // pred_check
      _
    $region23: #{tpu_custom_call.1} parent=1 // pred_check_branch
      %30 = sbr.rel (0) target = $region25
    $region24: #{tpu_custom_call.1} parent=1 // pred_region
      _
    $region25: #{tpu_custom_call.1} parent=1 // pred_fallthru
      _
    // Predicated region
    $region26: #{tpu_custom_call.1} parent=1 // pred_check
      _
    $region27: #{tpu_custom_call.1} parent=1 // pred_check_branch
      %32 = sbr.rel (0) target = $region29
    $region28: #{tpu_custom_call.1} parent=1 // pred_region
      _
    $region29: #{tpu_custom_call.1} parent=1 // pred_fallthru
      _
    %p33 = scmp.eq.s32.totalorder 0, 0
    // Predicated region
    $region30: #{tpu_custom_call.1} parent=1 // pred_check
      %p34 = pneg %p33
    $region31: #{tpu_custom_call.1} parent=1 // pred_check_branch
      %36 = sbr.rel (%p34) target = $region33
    $region32: #{tpu_custom_call.1} parent=1 // pred_region
      %s37 = scalar_lea.smem [#allocation6], 0
      %38 = sst [smem:[%s37]] 0.0
      %s39 = scalar_lea.smem [#allocation6], 1
      %40 = sst [smem:[%s39]] 0.0
      %s41 = scalar_lea.smem [#allocation6], 2
      %42 = sst [smem:[%s41]] 0.0
      %s43 = scalar_lea.smem [#allocation6], 3
      %44 = sst [smem:[%s43]] 0.0
    $region33: #{tpu_custom_call.1} parent=1 // pred_fallthru
      _
    %v45 = vld [vmem:[%s5] sm:$0xf]
    %v46 = vld [vmem:[%s6] sm:$0x1]
    %v47 = vld [vmem:[%s2] sm:$0xf]
    %49 = vset.pattern.permute.xlu0 0
    %50 = vperm.xlu0 %49, %v47
    %v51 = vpop.permute.xlu0 %50
    %v53 = vmul.f32 %v45, %v51
    %vm54 = vcmask 1043456
    %v55 = vsel %vm54, %v53, 0.0
    %v56 = vrot.slane %v55, 4
    %v57 = vadd.f32 %v55, %v56
    %v58 = vrot.slane %v57, 2
    %v59 = vadd.f32 %v57, %v58
    %v60 = vrot.slane %v59, 1
    %v61 = vadd.f32 %v59, %v60
    %v62 = vld [vmem:[#allocation4] sm:$0x1]
    %64 = vset.pattern.permute.xlu0 0
    %65 = vperm.xlu0 %64, %v62
    %v66 = vpop.permute.xlu0 %65
    %v68 = vlaneseq
    %v69 = vshrl.u32 %v68, 7
    %v70 = vsub.s32 0, %v69
    %v71 = vrot.slane %v66, %v70
    %v72 = vmul.f32 %v46, %v71
    %v73 = vadd.f32 %v72, 0.0
    %v74 = vadd.f32 %v61, %v73
    %s75 = sld [smem:[#allocation2]]
    %v76 = vstv %s75
    %v77 = vadd.f32 %v74, %v76
    %v78 = vld [vmem:[#allocation5] sm:$0x1]
    %80 = vset.pattern.permute.xlu0 0
    %81 = vperm.xlu0 %80, %v78
    %v82 = vpop.permute.xlu0 %81
    %v84 = vlaneseq
    %v85 = vshrl.u32 %v84, 7
    %v86 = vsub.s32 0, %v85
    %v87 = vrot.slane %v82, %v86
    %v88 = vmul.f32 %v46, %v87
    %v89 = vadd.f32 %v88, 0.0
    %s90 = sld [smem:[#allocation3]]
    %v91 = vstv %s90
    %v92 = vadd.f32 %v89, %v91
    %v93 = vlaneseq
    %v94 = vand.u32 %v93, 127
    %s95 = smul.u32 0, 128
    %v96 = vstv %s95
    %v97 = vadd.s32 %v94, %v96
    %vm98 = vcmp.lt.s32.totalorder %v97, 8
    %vm99 = vcmp.ge.s32.totalorder %v97, 8
    %vm100 = vcmp.lt.s32.totalorder %v97, 16
    %vm101 = vmand %vm99, %vm100
    %v102 = vsel %vm98, 1, 0
    %v103 = vcvt.s32.f32 %v102
    %v104 = vsel %vm101, %v77, -inf
    %v105 = vmul.f32 %v104, 1.442695
    %v106 = vpow.pop %v105
    %v107 = vsel %vm101, %v92, -inf
    %v108 = vmul.f32 %v107, 1.442695
    %v109 = vpow.pop %v108
    %s110 = sld [smem:[#allocation6]]
    %v111 = vmul.f32 %v77, %v103
    %vm112 = vcmask 1040384
    %v113 = vsel %vm112, %v111, 0.0
    %114 = vadd.xlane.f32.xlu0 %v113
    %v115 = vpop.xlane.xlu0 %114
    %v116 = vrot.slane %v115, 4
    %v117 = vadd.f32 %v115, %v116
    %v118 = vrot.slane %v117, 2
    %v119 = vadd.f32 %v117, %v118
    %v120 = vrot.slane %v119, 1
    %v121 = vadd.f32 %v119, %v120
    %s122 = vtos %v121
    %s123 = sadd.f32 %s110, %s122
    %s124 = scalar_lea.smem [#allocation6], 0
    %125 = sst [smem:[%s124]] %s123
    %s126 = sld [smem:[#allocation6 + $0x1]]
    %v127 = vsel %vm112, %v106, 0.0
    %128 = vadd.xlane.f32.xlu0 %v127
    %v129 = vpop.xlane.xlu0 %128
    %v130 = vrot.slane %v129, 4
    %v131 = vadd.f32 %v129, %v130
    %v132 = vrot.slane %v131, 2
    %v133 = vadd.f32 %v131, %v132
    %v134 = vrot.slane %v133, 1
    %v135 = vadd.f32 %v133, %v134
    %s136 = vtos %v135
    %s137 = sadd.f32 %s126, %s136
    %s138 = scalar_lea.smem [#allocation6], 1
    %139 = sst [smem:[%s138]] %s137
    %s140 = sld [smem:[#allocation6 + $0x2]]
    %v141 = vmul.f32 %v92, %v103
    %v142 = vsel %vm112, %v141, 0.0
    %143 = vadd.xlane.f32.xlu0 %v142
    %v144 = vpop.xlane.xlu0 %143
    %v145 = vrot.slane %v144, 4
    %v146 = vadd.f32 %v144, %v145
    %v147 = vrot.slane %v146, 2
    %v148 = vadd.f32 %v146, %v147
    %v149 = vrot.slane %v148, 1
    %v150 = vadd.f32 %v148, %v149
    %s151 = vtos %v150
    %s152 = sadd.f32 %s140, %s151
    %s153 = scalar_lea.smem [#allocation6], 2
    %154 = sst [smem:[%s153]] %s152
    %s155 = sld [smem:[#allocation6 + $0x3]]
    %v156 = vsel %vm112, %v109, 0.0
    %157 = vadd.xlane.f32.xlu0 %v156
    %v158 = vpop.xlane.xlu0 %157
    %v159 = vrot.slane %v158, 4
    %v160 = vadd.f32 %v158, %v159
    %v161 = vrot.slane %v160, 2
    %v162 = vadd.f32 %v160, %v161
    %v163 = vrot.slane %v162, 1
    %v164 = vadd.f32 %v162, %v163
    %s165 = vtos %v164
    %s166 = sadd.f32 %s155, %s165
    %s167 = scalar_lea.smem [#allocation6], 3
    %168 = sst [smem:[%s167]] %s166
    // Predicated region
    $region34: #{tpu_custom_call.1} parent=1 // pred_check
      _
    $region35: #{tpu_custom_call.1} parent=1 // pred_check_branch
      %170 = sbr.rel (0) target = $region37
    $region36: #{tpu_custom_call.1} parent=1 // pred_region
      %s172 = ssub.s32 16, 16
      %173 = vsyncadd [#allocation7], %s172
      %176 = dma.smem_to_hbm [#allocation6], 16, %s7, [#allocation7]
    $region37: #{tpu_custom_call.1} parent=1 // pred_fallthru
      _
    // Predicated region
    $region38: #{tpu_custom_call.1} parent=1 // pred_check
      _
    $region39: #{tpu_custom_call.1} parent=1 // pred_check_branch
      %178 = sbr.rel (0) target = $region41
    $region40: #{tpu_custom_call.1} parent=1 // pred_region
      %179 = dma.done [#allocation7], 16
    $region41: #{tpu_custom_call.1} parent=1 // pred_fallthru
      _
    %180 = sfence
    %181 = vsyncpa [#allocation7], 1

</llo_original>
